<compile_context>
chip_gen: v7x
topology: tpu7x:2x2x1
jax: 0.10.0
libtpu: 0.0.40
codegen_flags: <defaults>
</compile_context>

<pallas_src>
import math

import jax
import jax.numpy as jnp
from jax.experimental import pallas as pl
from jax.experimental.pallas import tpu as pltpu


def _build_pe_table(d_model: int, max_seq_length: int) -> jnp.ndarray:
    """Deterministic parameter setup, mirrors PositionalEncoding.__init__ (f32 buffer)."""
    position = jnp.arange(max_seq_length, dtype=jnp.float32)[:, None]          # (S, 1)
    div_term = jnp.exp(
        jnp.arange(0, d_model, 2, dtype=jnp.float32) * -(math.log(10000.0) / d_model)
    )                                                                           # (D/2,)
    angles = position * div_term                                                # (S, D/2)
    pe = jnp.zeros((max_seq_length, d_model), dtype=jnp.float32)
    pe = pe.at[:, 0::2].set(jnp.sin(angles))
    pe = pe.at[:, 1::2].set(jnp.cos(angles))
    return pe[None, :, :]                                                       # (1, S, D)


def _pe_add_kernel(x_ref, pe_ref, o_ref):
    # x_ref: (TB, TC) in x.dtype, pe_ref: (1, TC) in f32 -> broadcast add over batch rows.
    # Add in f32 (mirrors PyTorch's fp32 pe buffer), cast back on store.
    # Both casts are no-ops for f32 activations; cheap VPU ops otherwise.
    o_ref[...] = (x_ref[...].astype(jnp.float32) + pe_ref[...]).astype(o_ref.dtype)


_BLOCK_BUDGET = 8 * 1024 * 1024   # ~8 MiB of x per block; double-buffered plan ~34 MiB VMEM


def _choose_tiles(b: int, cols: int, itemsize: int):
    """Pick (tb, tc): dtype-aware sublane tile, lane-dense ~8 MiB column tile."""
    # Sublane (batch) tile: fill the native packed tile for the dtype
    # (8 rows for f32, 16 for bf16, 32 for int8/fp8), or the whole batch if small.
    sub = 8 * max(1, 4 // itemsize)
    if b <= sub:
        tb = b
    else:
        tb = min((b // sub) * sub, 8 * sub)
        for cand in range(tb, sub - 1, -sub):        # prefer a tb that divides b evenly
            if b % cand == 0:
                tb = cand
                break

    # Lane (column) tile: multiple of 128, ~_BLOCK_BUDGET bytes of x per block,
    # avoiding a ragged last column tile whenever cols is a multiple of 128.
    cap = max(128, _BLOCK_BUDGET // (tb * itemsize))
    cap = (cap // 128) * 128

    if cols <= cap:
        tc = cols
    elif cols % 128 == 0:
        units = cols // 128
        n0 = pl.cdiv(units, cap // 128)
        n_col = n0
        for cand in range(n0, min(n0 + 64, units) + 1):   # small divisor search (trace-time)
            if units % cand == 0:
                n_col = cand
                break
        if units % n_col == 0:
            tc = (units // n_col) * 128            # exact split: no masked tail stores
        else:
            tc = pl.cdiv(units, n0) * 128          # even-ish split, tail still 128-aligned
    else:
        tc = cap                                   # rare ragged tail (cols not 128-aligned)

    # v7x has 2 TensorCores: make sure a medium/large input gets >= 2 blocks so the
    # "parallel" grid axes can actually be sharded across cores.
    if (pl.cdiv(cols, tc) * pl.cdiv(b, tb) == 1
            and b * cols * itemsize >= (2 << 20) and cols >= 256):
        if cols % 256 == 0:
            tc = cols // 2
        elif cols % 128 == 0:
            tc = ((cols // 128 + 1) // 2) * 128

    return tb, tc


def positional_encoding_forward(x: jnp.ndarray, pe: jnp.ndarray) -> jnp.ndarray:
    """x: (B, S, D); pe: (1, max_seq, D) f32 buffer. Returns x + pe[:, :S] in x.dtype."""
    b, s, d = x.shape
    _, max_seq, d_pe = pe.shape
    assert d_pe == d, f"d_model mismatch: x has {d}, pe has {d_pe}"
    assert s <= max_seq, f"seq_len {s} exceeds max_seq_length {max_seq}"

    cols = s * d
    itemsize = jnp.dtype(x.dtype).itemsize
    tb, tc = _choose_tiles(b, cols, itemsize)

    # Free reshape: collapse (B, S, D) -> (B, S*D); rows are batches, lanes are S*D.
    x2 = x.reshape(b, cols)

    if tc % 128 == 0:
        # Pass the whole table flattened (free reshape, no HBM copy, no per-call cast);
        # the BlockSpec only ever touches the first `cols` lanes == pe[:, :s, :] flattened.
        pe2 = pe.reshape(1, max_seq * d)
    else:
        # Rare tiny case (cols < 128 / not 128-aligned single tile): block must equal
        # the full array dims, so slice the used prefix (tiny copy).
        pe2 = pe[:, :s, :].reshape(1, cols)

    # Grid: column tiles outer, batch tiles inner -> the pe block index only depends
    # on the outer axis, so pe is DMA'd once per column tile and reused across batches.
    grid = (pl.cdiv(cols, tc), pl.cdiv(b, tb))

    # VMEM budget: big enough for 8 MiB double-buffered blocks, but capped for v7x's
    # 64 MiB per-TC VMEM. Derived from the device rather than hard-coded.
    try:
        vmem_cap = pltpu.get_tpu_info().vmem_capacity_bytes
    except Exception:
        vmem_cap = 64 * 1024 * 1024
    vmem_limit = max(36 * 1024 * 1024, min(48 * 1024 * 1024, (vmem_cap * 3) // 4))

    cost = pl.CostEstimate(
        flops=b * cols,
        transcendentals=0,
        bytes_accessed=2 * b * cols * itemsize + cols * pe2.dtype.itemsize,
    )

    out2 = pl.pallas_call(
        _pe_add_kernel,
        out_shape=jax.ShapeDtypeStruct((b, cols), x.dtype),
        grid_spec=pltpu.PrefetchScalarGridSpec(
            num_scalar_prefetch=0,
            grid=grid,
            in_specs=[
                pl.BlockSpec((tb, tc), lambda j, i: (i, j)),   # x tile
                pl.BlockSpec((1, tc), lambda j, i: (0, j)),    # pe tile (batch-invariant)
            ],
            out_specs=pl.BlockSpec((tb, tc), lambda j, i: (i, j)),
        ),
        compiler_params=pltpu.CompilerParams(
            dimension_semantics=("parallel", "parallel"),
            vmem_limit_bytes=vmem_limit,
        ),
        cost_estimate=cost,
        input_output_aliases={0: 0},   # write the result in place of (donated) x
    )(x2, pe2)

    return out2.reshape(b, s, d)


if __name__ == "__main__":
    batch = 2
    seq_len = 8
    d_model = 32
    max_seq_length = 16

    key = jax.random.PRNGKey(0)
    x = jax.random.normal(key, (batch, seq_len, d_model), dtype=jnp.float32)

    pe = _build_pe_table(d_model, max_seq_length)

    # Reference (same math as the PyTorch forward).
    ref = x + pe[:, :seq_len]

    out = positional_encoding_forward(x, pe)
    out = jax.block_until_ready(out)

    assert out.shape == (batch, seq_len, d_model)
    assert out.dtype == x.dtype
    assert jnp.allclose(out, ref, atol=1e-6), "mismatch vs reference"

    print("KERNEL_OK")
</pallas_src>

<mosaic_0001>
module attributes {stable_mosaic.version = 11 : i64} {
  func.func @_pe_add_kernel(%arg0: i32, %arg1: i32, %arg2: memref<2x256xf32, #tpu.memory_space<vmem>>, %arg3: memref<1x256xf32, #tpu.memory_space<vmem>>, %arg4: memref<2x256xf32, #tpu.memory_space<vmem>>) attributes {dimension_semantics = [#tpu.dimension_semantics<parallel>, #tpu.dimension_semantics<parallel>], iteration_bounds = array<i64: 1, 1>, scalar_prefetch = 0 : i64, scratch_operands = 0 : i64, tpu.core_type = #tpu.core_type<tc>, window_params = [{transform_indices = @transform_0, window_bounds = array<i64: 2, 256>}, {transform_indices = @transform_1, window_bounds = array<i64: 1, 256>}, {transform_indices = @transform_2, window_bounds = array<i64: 2, 256>}]} {
    %c0 = arith.constant 0 : index
    %c0_0 = arith.constant 0 : index
    %0 = vector.load %arg2[%c0, %c0_0] : memref<2x256xf32, #tpu.memory_space<vmem>>, vector<2x256xf32>
    %c0_1 = arith.constant 0 : index
    %c0_2 = arith.constant 0 : index
    %1 = vector.load %arg3[%c0_1, %c0_2] : memref<1x256xf32, #tpu.memory_space<vmem>>, vector<1x256xf32>
    %2 = vector.broadcast %1 : vector<1x256xf32> to vector<2x256xf32>
    %3 = arith.addf %0, %2 : vector<2x256xf32>
    %c0_3 = arith.constant 0 : index
    %c0_4 = arith.constant 0 : index
    %4 = vector.load %arg4[%c0_3, %c0_4] : memref<2x256xf32, #tpu.memory_space<vmem>>, vector<2x256xf32>
    tpu.vector_store %arg4[%c0_3, %c0_4], %3 {strides = array<i32>} : memref<2x256xf32, #tpu.memory_space<vmem>>, vector<2x256xf32>,
    return
  }
  func.func @transform_0(%arg0: i32, %arg1: i32) -> (i32, i32) {
    %c0_i32 = arith.constant 0 : i32
    return %arg1, %arg0 : i32, i32
  }
  func.func @transform_1(%arg0: i32, %arg1: i32) -> (i32, i32) {
    %c0_i32 = arith.constant 0 : i32
    %c0_i32_0 = arith.constant 0 : i32
    return %c0_i32, %arg0 : i32, i32
  }
  func.func @transform_2(%arg0: i32, %arg1: i32) -> (i32, i32) {
    %c0_i32 = arith.constant 0 : i32
    return %arg1, %arg0 : i32, i32
  }
}

</mosaic_0001>

<llo_original>
// kernel: tpu_custom_call.1
$region0: #{tpu_custom_call.1}
  #allocation0 [shape = 'u32[]', space=smem, size = 0x4, offset = 0x4, fixed_abs, tag = 'smem constant byte address 0x4 - core index']
  #allocation1 [shape = 'u32[144,128]{1,0:T(1,128)}', space=vmem, size = 0x12000, scoped, tag = 'internal scratch']
  %s0 = inlined_call_operand.hbm [shape: f32[2,256], index: 0, kind: input, shape index: {}, may-alias: {0,2}]
  %s1 = inlined_call_operand.vmem [shape: f32[1,512], index: 1, kind: input, shape index: {}]
  %s2 = inlined_call_operand.hbm [shape: f32[2,256], index: 2, kind: output, shape index: {}, may-alias: {0,2}]
  %s3 = sld [smem:[#allocation0]]
  $region22: #{tpu_custom_call.1} parent=0
    _
  %s5 = ssub.s32 1, %s3
  %s6 = scalar_select 0, %s5, %s3
  $region1: #{tpu_custom_call.1} parent=0
    #allocation2 [shape = 'u8[2048]{0}', space=vmem, size = 0x800, scoped, tag = 'input window, operand 0, single buffered']
    #allocation3 [shape = 's32[1]{0}', space=sflag, size = 0x4, scoped, tag = 'scoped memory for tpu_custom_call.1']
    #allocation4 [shape = 's32[1]{0}', space=sflag, size = 0x4, scoped, tag = 'scoped memory for tpu_custom_call.1']
    #allocation5 [shape = 'u8[2048]{0}', space=vmem, size = 0x800, scoped, tag = 'output window, operand 0, single buffered']
    %7 = vsyncpa [#allocation3], 0
    %8 = vsyncpa [#allocation4], 0
    // Predicated region
    $region2: #{tpu_custom_call.1} parent=1 // pred_check
      _
    $region3: #{tpu_custom_call.1} parent=1 // pred_check_branch
      %10 = sbr.rel (0) target = $region5
    $region4: #{tpu_custom_call.1} parent=1 // pred_region
      %s12 = ssub.s32 64, 64
      %13 = vsyncadd [#allocation3], %s12
      %s15 = sshll.u32 [#allocation2], 4
      %s16 = int_to_ptr.vmem [resolvable:$true] %s15
      %18 = dma.hbm_to_vmem [thread:$0]  %s0, 64, %s16, [#allocation3]
    $region5: #{tpu_custom_call.1} parent=1 // pred_fallthru
      _
    // Predicated region
    $region6: #{tpu_custom_call.1} parent=1 // pred_check
      _
    $region7: #{tpu_custom_call.1} parent=1 // pred_check_branch
      %20 = sbr.rel (0) target = $region9
    $region8: #{tpu_custom_call.1} parent=1 // pred_region
      _
    $region9: #{tpu_custom_call.1} parent=1 // pred_fallthru
      _
    // Predicated region
    $region10: #{tpu_custom_call.1} parent=1 // pred_check
      _
    $region11: #{tpu_custom_call.1} parent=1 // pred_check_branch
      %22 = sbr.rel (0) target = $region13
    $region12: #{tpu_custom_call.1} parent=1 // pred_region
      %23 = dma.done [#allocation3], 64
    $region13: #{tpu_custom_call.1} parent=1 // pred_fallthru
      _
    %v24 = vld [vmem:[#allocation2] sm:$0xf]
    %v25 = vld [vmem:[%s1] sm:$0x3]
    %v27 = vlaneseq
    %v28 = vshrl.u32 %v27, 7
    %v29 = vsub.s32 0, %v28
    %v30 = vrot.slane %v25, %v29
    %v31 = vlaneseq
    %v32 = vshrl.u32 %v31, 7
    %v33 = vsub.s32 1, %v32
    %v34 = vrot.slane %v25, %v33
    %v35 = vcombine.low %v30, %v34
    %v37 = vunpack.c.l.s4 1983009808
    %v38 = vunpack.c.0.s8 %v37
    %v39 = vlaneseq
    %v40 = vshrl.u32 %v39, 7
    %v41 = vsub.s32 %v38, %v40
    %v42 = vrot.slane %v35, %v41
    %v44 = vadd.f32 %v24, %v42
    %45 = vst [vmem:[#allocation5] sm:$0xf] %v44
    // Predicated region
    $region14: #{tpu_custom_call.1} parent=1 // pred_check
      _
    $region15: #{tpu_custom_call.1} parent=1 // pred_check_branch
      %47 = sbr.rel (0) target = $region17
    $region16: #{tpu_custom_call.1} parent=1 // pred_region
      %s49 = ssub.s32 64, 64
      %50 = vsyncadd [#allocation4], %s49
      %s52 = sshll.u32 [#allocation5], 4
      %s53 = int_to_ptr.vmem [resolvable:$true] %s52
      %55 = dma.vmem_to_hbm [thread:$0]  %s53, 64, %s2, [#allocation4]
    $region17: #{tpu_custom_call.1} parent=1 // pred_fallthru
      _
    // Predicated region
    $region18: #{tpu_custom_call.1} parent=1 // pred_check
      _
    $region19: #{tpu_custom_call.1} parent=1 // pred_check_branch
      %57 = sbr.rel (0) target = $region21
    $region20: #{tpu_custom_call.1} parent=1 // pred_region
      %58 = dma.done [#allocation4], 64
    $region21: #{tpu_custom_call.1} parent=1 // pred_fallthru
      _
    %59 = vsyncpa [#allocation3], 1
    %60 = vsyncpa [#allocation4], 1

</llo_original>
